<compile_context>
chip_gen: v5e
topology: v5e:2x2
jax: 0.10.0
libtpu: 0.0.40
codegen_flags: <defaults>
</compile_context>

<pallas_src>
import jax
import jax.numpy as jnp
import numpy as np
from jax.experimental import pallas as pl
from jax.experimental.pallas import tpu as pltpu


def _round_up(a, m):
    return ((a + m - 1) // m) * m


def _split_div_mod(k, n):
    """(k // n, k % n) with shift/mask fast path for power-of-two n (static)."""
    if (n & (n - 1)) == 0:
        lg = n.bit_length() - 1
        return k >> lg, k & (n - 1)
    return k // n, k % n


def _split_div(k, n):
    if (n & (n - 1)) == 0:
        return k >> (n.bit_length() - 1)
    return k // n


def _make_kernel(group_gs, hidden, n_tail_layers):
    """group_gs: per-resolution-group grid sizes; hidden: width after folded layer 0."""
    n_groups = len(group_gs)

    def kernel(x_ref, *refs):
        table_refs = refs[: 2 * n_groups]                       # (T1_g, R_g) pairs
        b1_ref = refs[2 * n_groups]
        tail_refs = refs[2 * n_groups + 1: 2 * n_groups + 1 + 2 * n_tail_layers]
        out_ref = refs[-1]

        x = x_ref[...]                                          # (TB, 3) f32

        h_pre = None
        for gidx, G in enumerate(group_gs):
            t1_ref = table_refs[2 * gidx]                       # (G*G, G*H) bf16
            r_ref = table_refs[2 * gidx + 1]                    # (G*H, H)  f32

            # Per-axis corner indices / fractions (align_corners=True).
            u = (x + 1.0) * jnp.float32(0.5 * (G - 1))
            i0f = jnp.floor(u)
            frac = u - i0f                                      # (TB, 3)
            i0 = i0f.astype(jnp.int32)
            i1 = i0 + 1
            fx, fy, fz = frac[:, 0:1], frac[:, 1:2], frac[:, 2:3]
            x0, y0, z0 = i0[:, 0:1], i0[:, 1:2], i0[:, 2:3]
            x1, y1, z1 = i1[:, 0:1], i1[:, 1:2], i1[:, 2:3]

            # ---- stage 1: combined (z, y) one-hot weights -> one MXU matmul ----
            # Indices outside [0, G-1] never match -> weight 0 (padding_mode='zeros').
            gg = G * G
            p = jax.lax.broadcasted_iota(jnp.int32, (1, gg), 1)
            zi, yi = _split_div_mod(p, G)
            wz = jnp.where(zi == z0, 1.0 - fz, 0.0) + jnp.where(zi == z1, fz, 0.0)
            wy = jnp.where(yi == y0, 1.0 - fy, 0.0) + jnp.where(yi == y1, fy, 0.0)
            w_zy = (wz * wy).astype(jnp.bfloat16)               # (TB, G*G)
            a = jnp.dot(w_zy, t1_ref[...],
                        preferred_element_type=jnp.float32)     # (TB, G*H) f32

            # ---- stage 2: x-axis weights on lanes, reduce via fixed 0/1 matrix ----
            gh = G * hidden
            q = jax.lax.broadcasted_iota(jnp.int32, (1, gh), 1)
            xi = _split_div(q, hidden)                          # lane // H == x index
            wx = jnp.where(xi == x0, 1.0 - fx, 0.0) + jnp.where(xi == x1, fx, 0.0)
            part = jnp.dot(a * wx, r_ref[...],
                           preferred_element_type=jnp.float32)  # (TB, H) f32
            h_pre = part if h_pre is None else h_pre + part

        # Layer 0 bias + ReLU (its weights were folded into the tables offline).
        h = jnp.maximum(h_pre + b1_ref[...], 0.0)

        # Remaining MLP layers: hidden layers ReLU, final layer Sigmoid.
        for l in range(n_tail_layers):
            w = tail_refs[2 * l][...]
            b = tail_refs[2 * l + 1][...]
            h = jnp.dot(h, w, preferred_element_type=jnp.float32) + b
            if l < n_tail_layers - 1:
                h = jnp.maximum(h, 0.0)
            else:
                h = jax.nn.sigmoid(h)
        out_ref[...] = h.astype(out_ref.dtype)

    return kernel


def feature_grid_forward(x, grids, mlp_params, *, block_b=256):
    """x: (B, 3) f32 in [-1,1]; grids: list of (G,G,G,C) f32 arrays indexed [z,y,x,c];
    mlp_params: [(W, b), ...] with W (in,out), b (1,out)."""
    B = x.shape[0]
    hidden = mlp_params[0][0].shape[1]
    out_dim = mlp_params[-1][0].shape[1]
    out_pad = _round_up(out_dim, 128)               # lane-dense output, sliced after

    # --- fold MLP layer 0 into per-resolution tables (offline, f32) ---
    W1, b1 = mlp_params[0]
    W1 = jnp.asarray(W1, jnp.float32)
    tables = {}
    order = []
    col = 0
    for g in grids:
        G = int(g.shape[0])
        C = int(g.shape[-1])
        t = jnp.asarray(g, jnp.float32).reshape(G * G * G, C) @ W1[col:col + C, :]
        col += C
        if G in tables:
            tables[G] = tables[G] + t               # same-res grids share weights
        else:
            tables[G] = t
            order.append(G)
    group_gs = tuple(order)

    # TODO(synk): for very large G (folded table (G^2, G*H) bf16 > ~16 MiB) the
    # table should be tiled over its (z,y) rows with accumulation instead of
    # being kept fully resident in VMEM.
    t1_list, r_list = [], []
    for G in group_gs:
        t1_list.append(tables[G].reshape(G * G, G * hidden).astype(jnp.bfloat16))
        r_list.append(jnp.tile(jnp.eye(hidden, dtype=jnp.float32), (G, 1)))

    b1 = jnp.asarray(b1, jnp.float32).reshape(1, hidden)

    # --- remaining MLP layers; pad the last one to lane-dense output width ---
    n_lin = len(mlp_params)
    tail = []
    for l in range(1, n_lin):
        w, b = mlp_params[l]
        w = jnp.asarray(w, jnp.float32)
        b = jnp.asarray(b, jnp.float32).reshape(1, -1)
        if l == n_lin - 1 and w.shape[1] != out_pad:
            w = jnp.pad(w, ((0, 0), (0, out_pad - w.shape[1])))
            b = jnp.pad(b, ((0, 0), (0, out_pad - b.shape[1])))
        tail.extend([w, b])
    n_tail = n_lin - 1

    # --- batch tiling: >=2 tiles when possible (v7x megacore), no pure-padding
    #     tiles for tiny batches, tiles always a multiple of 8 rows. ---
    b8 = _round_up(B, 8)
    if b8 <= block_b:
        tb = b8 // 2 if (b8 >= 16 and b8 % 16 == 0) else b8
    else:
        tb = _round_up(block_b, 8)
    B_pad = _round_up(B, tb)
    xb = jnp.asarray(x, jnp.float32)
    if B_pad != B:
        xb = jnp.pad(xb, ((0, B_pad - B), (0, 0)))   # padded rows are sliced away
    n_blocks = B_pad // tb

    args = [xb] + [a for pair in zip(t1_list, r_list) for a in pair] + [b1] + tail

    def _const_spec(a):
        nd = a.ndim
        return pl.BlockSpec(a.shape, lambda i, nd=nd: (0,) * nd)

    in_specs = ([pl.BlockSpec((tb, 3), lambda i: (i, 0))]
                + [_const_spec(a) for a in args[1:]])
    out_specs = pl.BlockSpec((tb, out_pad), lambda i: (i, 0))

    kernel = _make_kernel(group_gs, hidden, n_tail)

    out = pl.pallas_call(
        kernel,
        out_shape=jax.ShapeDtypeStruct((B_pad, out_pad), jnp.float32),
        grid=(n_blocks,),
        in_specs=in_specs,
        out_specs=out_specs,
        compiler_params=pltpu.CompilerParams(
            dimension_semantics=("parallel",),
            vmem_limit_bytes=32 * 1024 * 1024),
    )(*args)
    return out[:B, :out_dim]


def init_params(key, grid_shape, num_feats, hidden, num_layers, out_dim):
    """grids: list of (G,G,G,C) f32 (z,y,x,c); mlp: [(W (in,out), b (1,out)), ...]."""
    n_grids = len(grid_shape)
    n_lin = num_layers + 1
    keys = jax.random.split(key, n_grids + 2 * n_lin)

    grids = []
    for i, G in enumerate(grid_shape):
        g = jax.random.uniform(keys[i], (G, G, G, num_feats),
                               minval=-1e-4, maxval=1e-4, dtype=jnp.float32)
        grids.append(g)

    dims = [num_feats * n_grids] + [hidden] * num_layers + [out_dim]
    mlp = []
    kidx = n_grids
    for l in range(n_lin):
        fan_in, fan_out = dims[l], dims[l + 1]
        bound = 1.0 / np.sqrt(fan_in)
        w = jax.random.uniform(keys[kidx], (fan_in, fan_out),
                               minval=-bound, maxval=bound, dtype=jnp.float32)
        b = jax.random.uniform(keys[kidx + 1], (1, fan_out),
                               minval=-bound, maxval=bound, dtype=jnp.float32)
        mlp.append((w, b))
        kidx += 2
    return grids, mlp


def reference_forward(x, grids, mlp_params, grid_sizes):
    """Pure-JAX f32 reference using an 8-corner gather (independent of the kernel
    formulation): trilinear, align_corners=True, zeros padding (inputs in [-1,1])."""
    feats = []
    for g, G in zip(grids, grid_sizes):
        G = int(G)
        u = (x + 1.0) * (0.5 * (G - 1))
        i0f = jnp.floor(u)
        f = u - i0f
        i0 = jnp.clip(i0f.astype(jnp.int32), 0, G - 1)
        i1 = jnp.clip(i0 + 1, 0, G - 1)
        fx, fy, fz = f[:, 0], f[:, 1], f[:, 2]
        x0, y0, z0 = i0[:, 0], i0[:, 1], i0[:, 2]
        x1, y1, z1 = i1[:, 0], i1[:, 1], i1[:, 2]

        def gv(zz, yy, xx):
            return g[zz, yy, xx]                     # (B, C)

        c = (gv(z0, y0, x0) * ((1 - fz) * (1 - fy) * (1 - fx))[:, None]
             + gv(z0, y0, x1) * ((1 - fz) * (1 - fy) * fx)[:, None]
             + gv(z0, y1, x0) * ((1 - fz) * fy * (1 - fx))[:, None]
             + gv(z0, y1, x1) * ((1 - fz) * fy * fx)[:, None]
             + gv(z1, y0, x0) * (fz * (1 - fy) * (1 - fx))[:, None]
             + gv(z1, y0, x1) * (fz * (1 - fy) * fx)[:, None]
             + gv(z1, y1, x0) * (fz * fy * (1 - fx))[:, None]
             + gv(z1, y1, x1) * (fz * fy * fx)[:, None])
        feats.append(c)
    h = jnp.concatenate(feats, axis=1)
    n = len(mlp_params)
    for l, (w, b) in enumerate(mlp_params):
        h = h @ w + b
        h = jax.nn.relu(h) if l < n - 1 else jax.nn.sigmoid(h)
    return h


if __name__ == "__main__":
    # Shapes consistent with the module: 3 decomposed 16^3 grids, num_feats=4,
    # hidden=32, num_layers=2 (=> 3 linear layers), output_dim=4, batch=8.
    grid_shape = [16, 16, 16]
    num_feats = 4
    hidden_nodes = 32
    num_layers = 2
    output_dim = 4
    batch = 8

    key = jax.random.PRNGKey(0)
    kx, kp = jax.random.split(key)
    x = jax.random.uniform(kx, (batch, 3), minval=-1.0, maxval=1.0,
                           dtype=jnp.float32)
    grids, mlp = init_params(kp, grid_shape, num_feats, hidden_nodes,
                             num_layers, output_dim)

    out = feature_grid_forward(x, grids, mlp)
    out = jax.block_until_ready(out)

    ref = jax.block_until_ready(reference_forward(x, grids, mlp, grid_shape))
    assert out.shape == (batch, output_dim)
    np.testing.assert_allclose(np.asarray(out), np.asarray(ref),
                               rtol=1e-2, atol=1e-2)
    print("KERNEL_OK")
</pallas_src>

<mosaic_0001>
module attributes {stable_mosaic.version = 11 : i64} {
  func.func @kernel(%arg0: i32, %arg1: memref<8x3xf32, #tpu.memory_space<vmem>>, %arg2: memref<256x512xbf16, #tpu.memory_space<vmem>>, %arg3: memref<512x32xf32, #tpu.memory_space<vmem>>, %arg4: memref<1x32xf32, #tpu.memory_space<vmem>>, %arg5: memref<32x32xf32, #tpu.memory_space<vmem>>, %arg6: memref<1x32xf32, #tpu.memory_space<vmem>>, %arg7: memref<32x128xf32, #tpu.memory_space<vmem>>, %arg8: memref<1x128xf32, #tpu.memory_space<vmem>>, %arg9: memref<8x128xf32, #tpu.memory_space<vmem>>) attributes {dimension_semantics = [#tpu.dimension_semantics<parallel>], iteration_bounds = array<i64: 1>, scalar_prefetch = 0 : i64, scratch_operands = 0 : i64, tpu.core_type = #tpu.core_type<tc>, window_params = [{transform_indices = @transform_0, window_bounds = array<i64: 8, 3>}, {pipeline_mode = #tpu.pipeline_mode<synchronous>, transform_indices = @transform_1, window_bounds = array<i64: 256, 512>}, {pipeline_mode = #tpu.pipeline_mode<synchronous>, transform_indices = @transform_2, window_bounds = array<i64: 512, 32>}, {pipeline_mode = #tpu.pipeline_mode<synchronous>, transform_indices = @transform_3, window_bounds = array<i64: 1, 32>}, {pipeline_mode = #tpu.pipeline_mode<synchronous>, transform_indices = @transform_4, window_bounds = array<i64: 32, 32>}, {pipeline_mode = #tpu.pipeline_mode<synchronous>, transform_indices = @transform_5, window_bounds = array<i64: 1, 32>}, {pipeline_mode = #tpu.pipeline_mode<synchronous>, transform_indices = @transform_6, window_bounds = array<i64: 32, 128>}, {pipeline_mode = #tpu.pipeline_mode<synchronous>, transform_indices = @transform_7, window_bounds = array<i64: 1, 128>}, {transform_indices = @transform_8, window_bounds = array<i64: 8, 128>}]} {
    %c0 = arith.constant 0 : index
    %c0_0 = arith.constant 0 : index
    %0 = vector.load %arg1[%c0, %c0_0] : memref<8x3xf32, #tpu.memory_space<vmem>>, vector<8x3xf32>
    %cst = arith.constant 1.000000e+00 : f32
    %1 = vector.broadcast %cst : f32 to vector<8x3xf32>
    %2 = arith.addf %0, %1 : vector<8x3xf32>
    %cst_1 = arith.constant 7.500000e+00 : f32
    %3 = vector.broadcast %cst_1 : f32 to vector<8x3xf32>
    %4 = arith.mulf %2, %3 : vector<8x3xf32>
    %5 = math.floor %4 : vector<8x3xf32>
    %6 = arith.subf %4, %5 : vector<8x3xf32>
    %7 = arith.fptosi %5 : vector<8x3xf32> to vector<8x3xi32>
    %c1_i32 = arith.constant 1 : i32
    %8 = vector.broadcast %c1_i32 : i32 to vector<8x3xi32>
    %9 = arith.addi %7, %8 : vector<8x3xi32>
    %10 = vector.extract_strided_slice %6 {offsets = [0, 0], sizes = [8, 1], strides = [1, 1]} : vector<8x3xf32> to vector<8x1xf32>
    %11 = vector.extract_strided_slice %6 {offsets = [0, 1], sizes = [8, 1], strides = [1, 1]} : vector<8x3xf32> to vector<8x1xf32>
    %12 = vector.extract_strided_slice %6 {offsets = [0, 2], sizes = [8, 1], strides = [1, 1]} : vector<8x3xf32> to vector<8x1xf32>
    %13 = vector.extract_strided_slice %7 {offsets = [0, 0], sizes = [8, 1], strides = [1, 1]} : vector<8x3xi32> to vector<8x1xi32>
    %14 = vector.extract_strided_slice %7 {offsets = [0, 1], sizes = [8, 1], strides = [1, 1]} : vector<8x3xi32> to vector<8x1xi32>
    %15 = vector.extract_strided_slice %7 {offsets = [0, 2], sizes = [8, 1], strides = [1, 1]} : vector<8x3xi32> to vector<8x1xi32>
    %16 = vector.extract_strided_slice %9 {offsets = [0, 0], sizes = [8, 1], strides = [1, 1]} : vector<8x3xi32> to vector<8x1xi32>
    %17 = vector.extract_strided_slice %9 {offsets = [0, 1], sizes = [8, 1], strides = [1, 1]} : vector<8x3xi32> to vector<8x1xi32>
    %18 = vector.extract_strided_slice %9 {offsets = [0, 2], sizes = [8, 1], strides = [1, 1]} : vector<8x3xi32> to vector<8x1xi32>
    %19 = tpu.iota {dimensions = array<i32: 1>} : vector<1x256xi32>
    %c4_i32 = arith.constant 4 : i32
    %20 = vector.broadcast %c4_i32 : i32 to vector<1x256xi32>
    %21 = arith.shrsi %19, %20 : vector<1x256xi32>
    %c15_i32 = arith.constant 15 : i32
    %22 = vector.broadcast %c15_i32 : i32 to vector<1x256xi32>
    %23 = arith.andi %19, %22 : vector<1x256xi32>
    %24 = vector.broadcast %21 : vector<1x256xi32> to vector<8x256xi32>
    %25 = vector.broadcast %15 : vector<8x1xi32> to vector<8x256xi32>
    %26 = arith.cmpi eq, %24, %25 : vector<8x256xi32>
    %cst_2 = arith.constant 1.000000e+00 : f32
    %27 = vector.broadcast %cst_2 : f32 to vector<8x1xf32>
    %28 = arith.subf %27, %12 : vector<8x1xf32>
    %cst_3 = arith.constant 0.000000e+00 : f32
    %29 = vector.shape_cast %28 : vector<8x1xf32> to vector<8x1xf32>
    %30 = vector.broadcast %29 : vector<8x1xf32> to vector<8x256xf32>
    %31 = vector.broadcast %cst_3 : f32 to vector<8x256xf32>
    %32 = arith.select %26, %30, %31 : vector<8x256xi1>, vector<8x256xf32>
    %33 = vector.broadcast %21 : vector<1x256xi32> to vector<8x256xi32>
    %34 = vector.broadcast %18 : vector<8x1xi32> to vector<8x256xi32>
    %35 = arith.cmpi eq, %33, %34 : vector<8x256xi32>
    %cst_4 = arith.constant 0.000000e+00 : f32
    %36 = vector.shape_cast %12 : vector<8x1xf32> to vector<8x1xf32>
    %37 = vector.broadcast %36 : vector<8x1xf32> to vector<8x256xf32>
    %38 = vector.broadcast %cst_4 : f32 to vector<8x256xf32>
    %39 = arith.select %35, %37, %38 : vector<8x256xi1>, vector<8x256xf32>
    %40 = arith.addf %32, %39 : vector<8x256xf32>
    %41 = vector.broadcast %23 : vector<1x256xi32> to vector<8x256xi32>
    %42 = vector.broadcast %14 : vector<8x1xi32> to vector<8x256xi32>
    %43 = arith.cmpi eq, %41, %42 : vector<8x256xi32>
    %cst_5 = arith.constant 1.000000e+00 : f32
    %44 = vector.broadcast %cst_5 : f32 to vector<8x1xf32>
    %45 = arith.subf %44, %11 : vector<8x1xf32>
    %cst_6 = arith.constant 0.000000e+00 : f32
    %46 = vector.shape_cast %45 : vector<8x1xf32> to vector<8x1xf32>
    %47 = vector.broadcast %46 : vector<8x1xf32> to vector<8x256xf32>
    %48 = vector.broadcast %cst_6 : f32 to vector<8x256xf32>
    %49 = arith.select %43, %47, %48 : vector<8x256xi1>, vector<8x256xf32>
    %50 = vector.broadcast %23 : vector<1x256xi32> to vector<8x256xi32>
    %51 = vector.broadcast %17 : vector<8x1xi32> to vector<8x256xi32>
    %52 = arith.cmpi eq, %50, %51 : vector<8x256xi32>
    %cst_7 = arith.constant 0.000000e+00 : f32
    %53 = vector.shape_cast %11 : vector<8x1xf32> to vector<8x1xf32>
    %54 = vector.broadcast %53 : vector<8x1xf32> to vector<8x256xf32>
    %55 = vector.broadcast %cst_7 : f32 to vector<8x256xf32>
    %56 = arith.select %52, %54, %55 : vector<8x256xi1>, vector<8x256xf32>
    %57 = arith.addf %49, %56 : vector<8x256xf32>
    %58 = arith.mulf %40, %57 : vector<8x256xf32>
    %59 = arith.truncf %58 : vector<8x256xf32> to vector<8x256xbf16>
    %c0_8 = arith.constant 0 : index
    %c0_9 = arith.constant 0 : index
    %60 = vector.load %arg2[%c0_8, %c0_9] : memref<256x512xbf16, #tpu.memory_space<vmem>>, vector<256x512xbf16>
    %cst_10 = arith.constant dense<0.000000e+00> : vector<8x512xf32>
    %61 = tpu.matmul %59, %60, %cst_10 {dimension_numbers = #tpu.dot_dimension_numbers<[1], [0], [0], [1], [0, 0, 1, 1], [], []>} : vector<8x256xbf16>, vector<256x512xbf16>, vector<8x512xf32> -> vector<8x512xf32>
    %62 = tpu.iota {dimensions = array<i32: 1>} : vector<1x512xi32>
    %c5_i32 = arith.constant 5 : i32
    %63 = vector.broadcast %c5_i32 : i32 to vector<1x512xi32>
    %64 = arith.shrsi %62, %63 : vector<1x512xi32>
    %65 = vector.broadcast %64 : vector<1x512xi32> to vector<8x512xi32>
    %66 = vector.broadcast %13 : vector<8x1xi32> to vector<8x512xi32>
    %67 = arith.cmpi eq, %65, %66 : vector<8x512xi32>
    %cst_11 = arith.constant 1.000000e+00 : f32
    %68 = vector.broadcast %cst_11 : f32 to vector<8x1xf32>
    %69 = arith.subf %68, %10 : vector<8x1xf32>
    %cst_12 = arith.constant 0.000000e+00 : f32
    %70 = vector.shape_cast %69 : vector<8x1xf32> to vector<8x1xf32>
    %71 = vector.broadcast %70 : vector<8x1xf32> to vector<8x512xf32>
    %72 = vector.broadcast %cst_12 : f32 to vector<8x512xf32>
    %73 = arith.select %67, %71, %72 : vector<8x512xi1>, vector<8x512xf32>
    %74 = vector.broadcast %64 : vector<1x512xi32> to vector<8x512xi32>
    %75 = vector.broadcast %16 : vector<8x1xi32> to vector<8x512xi32>
    %76 = arith.cmpi eq, %74, %75 : vector<8x512xi32>
    %cst_13 = arith.constant 0.000000e+00 : f32
    %77 = vector.shape_cast %10 : vector<8x1xf32> to vector<8x1xf32>
    %78 = vector.broadcast %77 : vector<8x1xf32> to vector<8x512xf32>
    %79 = vector.broadcast %cst_13 : f32 to vector<8x512xf32>
    %80 = arith.select %76, %78, %79 : vector<8x512xi1>, vector<8x512xf32>
    %81 = arith.addf %73, %80 : vector<8x512xf32>
    %82 = arith.mulf %61, %81 : vector<8x512xf32>
    %c0_14 = arith.constant 0 : index
    %c0_15 = arith.constant 0 : index
    %83 = vector.load %arg3[%c0_14, %c0_15] : memref<512x32xf32, #tpu.memory_space<vmem>>, vector<512x32xf32>
    %cst_16 = arith.constant dense<0.000000e+00> : vector<8x32xf32>
    %84 = tpu.matmul %82, %83, %cst_16 {dimension_numbers = #tpu.dot_dimension_numbers<[1], [0], [0], [1], [0, 0, 1, 1], [], []>} : vector<8x512xf32>, vector<512x32xf32>, vector<8x32xf32> -> vector<8x32xf32>
    %c0_17 = arith.constant 0 : index
    %c0_18 = arith.constant 0 : index
    %85 = vector.load %arg4[%c0_17, %c0_18] : memref<1x32xf32, #tpu.memory_space<vmem>>, vector<1x32xf32>
    %86 = vector.broadcast %85 : vector<1x32xf32> to vector<8x32xf32>
    %87 = arith.addf %84, %86 : vector<8x32xf32>
    %cst_19 = arith.constant 0.000000e+00 : f32
    %88 = vector.broadcast %cst_19 : f32 to vector<8x32xf32>
    %89 = arith.maximumf %87, %88 : vector<8x32xf32>
    %c0_20 = arith.constant 0 : index
    %c0_21 = arith.constant 0 : index
    %90 = vector.load %arg5[%c0_20, %c0_21] : memref<32x32xf32, #tpu.memory_space<vmem>>, vector<32x32xf32>
    %c0_22 = arith.constant 0 : index
    %c0_23 = arith.constant 0 : index
    %91 = vector.load %arg6[%c0_22, %c0_23] : memref<1x32xf32, #tpu.memory_space<vmem>>, vector<1x32xf32>
    %cst_24 = arith.constant dense<0.000000e+00> : vector<8x32xf32>
    %92 = tpu.matmul %89, %90, %cst_24 {dimension_numbers = #tpu.dot_dimension_numbers<[1], [0], [0], [1], [0, 0, 1, 1], [], []>} : vector<8x32xf32>, vector<32x32xf32>, vector<8x32xf32> -> vector<8x32xf32>
    %93 = vector.broadcast %91 : vector<1x32xf32> to vector<8x32xf32>
    %94 = arith.addf %92, %93 : vector<8x32xf32>
    %cst_25 = arith.constant 0.000000e+00 : f32
    %95 = vector.broadcast %cst_25 : f32 to vector<8x32xf32>
    %96 = arith.maximumf %94, %95 : vector<8x32xf32>
    %c0_26 = arith.constant 0 : index
    %c0_27 = arith.constant 0 : index
    %97 = vector.load %arg7[%c0_26, %c0_27] : memref<32x128xf32, #tpu.memory_space<vmem>>, vector<32x128xf32>
    %c0_28 = arith.constant 0 : index
    %c0_29 = arith.constant 0 : index
    %98 = vector.load %arg8[%c0_28, %c0_29] : memref<1x128xf32, #tpu.memory_space<vmem>>, vector<1x128xf32>
    %cst_30 = arith.constant dense<0.000000e+00> : vector<8x128xf32>
    %99 = tpu.matmul %96, %97, %cst_30 {dimension_numbers = #tpu.dot_dimension_numbers<[1], [0], [0], [1], [0, 0, 1, 1], [], []>} : vector<8x32xf32>, vector<32x128xf32>, vector<8x128xf32> -> vector<8x128xf32>
    %100 = vector.broadcast %98 : vector<1x128xf32> to vector<8x128xf32>
    %101 = arith.addf %99, %100 : vector<8x128xf32>
    %102 = arith.negf %101 : vector<8x128xf32>
    %103 = math.exp %102 : vector<8x128xf32>
    %cst_31 = arith.constant 1.000000e+00 : f32
    %104 = vector.broadcast %cst_31 : f32 to vector<8x128xf32>
    %105 = arith.addf %104, %103 : vector<8x128xf32>
    %106 = arith.divf %104, %105 : vector<8x128xf32>
    %c0_32 = arith.constant 0 : index
    %c0_33 = arith.constant 0 : index
    %107 = vector.load %arg9[%c0_32, %c0_33] : memref<8x128xf32, #tpu.memory_space<vmem>>, vector<8x128xf32>
    tpu.vector_store %arg9[%c0_32, %c0_33], %106 {strides = array<i32>} : memref<8x128xf32, #tpu.memory_space<vmem>>, vector<8x128xf32>,
    return
  }
  func.func @transform_0(%arg0: i32) -> (i32, i32) {
    %c0_i32 = arith.constant 0 : i32
    %c0_i32_0 = arith.constant 0 : i32
    return %arg0, %c0_i32 : i32, i32
  }
  func.func @transform_1(%arg0: i32) -> (i32, i32) {
    %c0_i32 = arith.constant 0 : i32
    %c0_i32_0 = arith.constant 0 : i32
    %c0_i32_1 = arith.constant 0 : i32
    return %c0_i32, %c0_i32_0 : i32, i32
  }
  func.func @transform_2(%arg0: i32) -> (i32, i32) {
    %c0_i32 = arith.constant 0 : i32
    %c0_i32_0 = arith.constant 0 : i32
    %c0_i32_1 = arith.constant 0 : i32
    return %c0_i32, %c0_i32_0 : i32, i32
  }
  func.func @transform_3(%arg0: i32) -> (i32, i32) {
    %c0_i32 = arith.constant 0 : i32
    %c0_i32_0 = arith.constant 0 : i32
    %c0_i32_1 = arith.constant 0 : i32
    return %c0_i32, %c0_i32_0 : i32, i32
  }
  func.func @transform_4(%arg0: i32) -> (i32, i32) {
    %c0_i32 = arith.constant 0 : i32
    %c0_i32_0 = arith.constant 0 : i32
    %c0_i32_1 = arith.constant 0 : i32
    return %c0_i32, %c0_i32_0 : i32, i32
  }
  func.func @transform_5(%arg0: i32) -> (i32, i32) {
    %c0_i32 = arith.constant 0 : i32
    %c0_i32_0 = arith.constant 0 : i32
    %c0_i32_1 = arith.constant 0 : i32
    return %c0_i32, %c0_i32_0 : i32, i32
  }
  func.func @transform_6(%arg0: i32) -> (i32, i32) {
    %c0_i32 = arith.constant 0 : i32
    %c0_i32_0 = arith.constant 0 : i32
    %c0_i32_1 = arith.constant 0 : i32
    return %c0_i32, %c0_i32_0 : i32, i32
  }
  func.func @transform_7(%arg0: i32) -> (i32, i32) {
    %c0_i32 = arith.constant 0 : i32
    %c0_i32_0 = arith.constant 0 : i32
    %c0_i32_1 = arith.constant 0 : i32
    return %c0_i32, %c0_i32_0 : i32, i32
  }
  func.func @transform_8(%arg0: i32) -> (i32, i32) {
    %c0_i32 = arith.constant 0 : i32
    %c0_i32_0 = arith.constant 0 : i32
    return %arg0, %c0_i32 : i32, i32
  }
}

</mosaic_0001>

<llo_original>
// kernel: tpu_custom_call.1
$region0: #{tpu_custom_call.1}
  #allocation0 [shape = 'u32[]', space=smem, size = 0x4, offset = 0x4, fixed_abs, tag = 'smem constant byte address 0x4 - core index']
  #allocation1 [shape = 'u32[72,128]{1,0:T(1,128)}', space=vmem, size = 0x9000, scoped, tag = 'internal scratch']
  %s0 = inlined_call_operand.vmem [shape: f32[8,3], index: 0, kind: input, shape index: {}]
  %s1 = inlined_call_operand.vmem [shape: bf16[256,512], index: 1, kind: input, shape index: {}]
  %s2 = inlined_call_operand.vmem [shape: f32[512,32], index: 2, kind: input, shape index: {}]
  %s3 = inlined_call_operand.vmem [shape: f32[1,32], index: 3, kind: input, shape index: {}]
  %s4 = inlined_call_operand.vmem [shape: f32[32,32], index: 4, kind: input, shape index: {}]
  %s5 = inlined_call_operand.vmem [shape: f32[1,32], index: 5, kind: input, shape index: {}]
  %s6 = inlined_call_operand.vmem [shape: f32[32,128], index: 6, kind: input, shape index: {}]
  %s7 = inlined_call_operand.vmem [shape: f32[1,128], index: 7, kind: input, shape index: {}]
  %s8 = inlined_call_operand.hbm [shape: f32[8,128], index: 8, kind: output, shape index: {}]
  %s9 = sld [smem:[#allocation0]]
  $region42: #{tpu_custom_call.1} parent=0
    _
  %s11 = ssub.s32 1, %s9
  %s12 = scalar_select 0, %s11, %s9
  $region1: #{tpu_custom_call.1} parent=0
    #allocation2 [shape = 'u8[4096]{0}', space=vmem, size = 0x1000, scoped, tag = 'output window, operand 0, single buffered']
    #allocation3 [shape = 's32[1]{0}', space=sflag, size = 0x4, scoped, tag = 'scoped memory for tpu_custom_call.1']
    %13 = vsyncpa [#allocation3], 0
    // Predicated region
    $region2: #{tpu_custom_call.1} parent=1 // pred_check
      _
    $region3: #{tpu_custom_call.1} parent=1 // pred_check_branch
      %15 = sbr.rel (0) target = $region5
    $region4: #{tpu_custom_call.1} parent=1 // pred_region
      _
    $region5: #{tpu_custom_call.1} parent=1 // pred_fallthru
      _
    // Predicated region
    $region6: #{tpu_custom_call.1} parent=1 // pred_check
      _
    $region7: #{tpu_custom_call.1} parent=1 // pred_check_branch
      %17 = sbr.rel (0) target = $region9
    $region8: #{tpu_custom_call.1} parent=1 // pred_region
      _
    $region9: #{tpu_custom_call.1} parent=1 // pred_fallthru
      _
    // Predicated region
    $region10: #{tpu_custom_call.1} parent=1 // pred_check
      _
    $region11: #{tpu_custom_call.1} parent=1 // pred_check_branch
      %19 = sbr.rel (0) target = $region13
    $region12: #{tpu_custom_call.1} parent=1 // pred_region
      _
    $region13: #{tpu_custom_call.1} parent=1 // pred_fallthru
      _
    // Predicated region
    $region14: #{tpu_custom_call.1} parent=1 // pred_check
      _
    $region15: #{tpu_custom_call.1} parent=1 // pred_check_branch
      %21 = sbr.rel (0) target = $region17
    $region16: #{tpu_custom_call.1} parent=1 // pred_region
      _
    $region17: #{tpu_custom_call.1} parent=1 // pred_fallthru
      _
    // Predicated region
    $region18: #{tpu_custom_call.1} parent=1 // pred_check
      _
    $region19: #{tpu_custom_call.1} parent=1 // pred_check_branch
      %23 = sbr.rel (0) target = $region21
    $region20: #{tpu_custom_call.1} parent=1 // pred_region
      _
    $region21: #{tpu_custom_call.1} parent=1 // pred_fallthru
      _
    // Predicated region
    $region22: #{tpu_custom_call.1} parent=1 // pred_check
      _
    $region23: #{tpu_custom_call.1} parent=1 // pred_check_branch
      %25 = sbr.rel (0) target = $region25
    $region24: #{tpu_custom_call.1} parent=1 // pred_region
      _
    $region25: #{tpu_custom_call.1} parent=1 // pred_fallthru
      _
    // Predicated region
    $region26: #{tpu_custom_call.1} parent=1 // pred_check
      _
    $region27: #{tpu_custom_call.1} parent=1 // pred_check_branch
      %27 = sbr.rel (0) target = $region29
    $region28: #{tpu_custom_call.1} parent=1 // pred_region
      _
    $region29: #{tpu_custom_call.1} parent=1 // pred_fallthru
      _
    // Predicated region
    $region30: #{tpu_custom_call.1} parent=1 // pred_check
      _
    $region31: #{tpu_custom_call.1} parent=1 // pred_check_branch
      %29 = sbr.rel (0) target = $region33
    $region32: #{tpu_custom_call.1} parent=1 // pred_region
      _
    $region33: #{tpu_custom_call.1} parent=1 // pred_fallthru
      _
    %v30 = vld [vmem:[%s0] sm:$0xff]
    %v31 = vadd.f32 %v30, 1.0
    %v32 = vmul.f32 %v31, 7.5
    %v33 = vfloor.f32 %v32
    %v34 = vsub.f32 %v32, %v33
    %v35 = vcvt.f32.s32.to.zero.pseudo %v33
    %v36 = vadd.s32 %v35, 1
    %v37 = vlaneseq
    %v38 = vand.u32 %v37, 127
    %v39 = vadd.s32 %v38, 128
    %v40 = vshra.s32 %v38, 4
    %v41 = vshra.s32 %v39, 4
    %v42 = vand.u32 %v38, 15
    %v43 = vand.u32 %v39, 15
    %44 = vset.pattern.permute.xlu0 2
    %45 = vperm.xlu0 %44, %v35
    %v46 = vpop.permute.xlu0 %45
    %vm47 = vcmp.eq.s32.totalorder %v40, %v46
    %vm48 = vcmp.eq.s32.totalorder %v41, %v46
    %v49 = vsub.f32 1.0, %v34
    %51 = vset.pattern.permute.xlu0 2
    %52 = vperm.xlu0 %51, %v49
    %v53 = vpop.permute.xlu0 %52
    %v55 = vsel %vm47, %v53, 0.0
    %v56 = vsel %vm48, %v53, 0.0
    %57 = vset.pattern.permute.xlu0 2
    %58 = vperm.xlu0 %57, %v36
    %v59 = vpop.permute.xlu0 %58
    %vm60 = vcmp.eq.s32.totalorder %v40, %v59
    %vm61 = vcmp.eq.s32.totalorder %v41, %v59
    %63 = vset.pattern.permute.xlu0 2
    %64 = vperm.xlu0 %63, %v34
    %v65 = vpop.permute.xlu0 %64
    %v67 = vsel %vm60, %v65, 0.0
    %v68 = vsel %vm61, %v65, 0.0
    %v69 = vadd.f32 %v55, %v67
    %v70 = vadd.f32 %v56, %v68
    %71 = vset.pattern.permute.xlu0 1
    %72 = vperm.xlu0 %71, %v35
    %v73 = vpop.permute.xlu0 %72
    %vm74 = vcmp.eq.s32.totalorder %v42, %v73
    %vm75 = vcmp.eq.s32.totalorder %v43, %v73
    %76 = vset.pattern.permute.xlu0 1
    %77 = vperm.xlu0 %76, %v49
    %v78 = vpop.permute.xlu0 %77
    %v80 = vsel %vm74, %v78, 0.0
    %v81 = vsel %vm75, %v78, 0.0
    %82 = vset.pattern.permute.xlu0 1
    %83 = vperm.xlu0 %82, %v36
    %v84 = vpop.permute.xlu0 %83
    %vm85 = vcmp.eq.s32.totalorder %v42, %v84
    %vm86 = vcmp.eq.s32.totalorder %v43, %v84
    %87 = vset.pattern.permute.xlu0 1
    %88 = vperm.xlu0 %87, %v34
    %v89 = vpop.permute.xlu0 %88
    %v91 = vsel %vm85, %v89, 0.0
    %v92 = vsel %vm86, %v89, 0.0
    %v93 = vadd.f32 %v80, %v91
    %v94 = vadd.f32 %v81, %v92
    %v95 = vmul.f32 %v69, %v93
    %v96 = vmul.f32 %v70, %v94
    %v97 = vpack.c.bf16 %v95, %v95
    %v98 = vpack.c.bf16 %v96, %v96
    %v99 = vld [vmem:[%s1] sm:$0xff]
    %v100 = vld [vmem:[%s1 + $0x8] sm:$0xff]
    %v101 = vld [vmem:[%s1 + $0x10] sm:$0xff]
    %v102 = vld [vmem:[%s1 + $0x18] sm:$0xff]
    %v103 = vld [vmem:[%s1 + $0x20] sm:$0xff]
    %v104 = vld [vmem:[%s1 + $0x28] sm:$0xff]
    %v105 = vld [vmem:[%s1 + $0x30] sm:$0xff]
    %v106 = vld [vmem:[%s1 + $0x38] sm:$0xff]
    %v107 = vld [vmem:[%s1 + $0x40] sm:$0xff]
    %v108 = vld [vmem:[%s1 + $0x48] sm:$0xff]
    %v109 = vld [vmem:[%s1 + $0x50] sm:$0xff]
    %v110 = vld [vmem:[%s1 + $0x58] sm:$0xff]
    %v111 = vld [vmem:[%s1 + $0x60] sm:$0xff]
    %v112 = vld [vmem:[%s1 + $0x68] sm:$0xff]
    %v113 = vld [vmem:[%s1 + $0x70] sm:$0xff]
    %v114 = vld [vmem:[%s1 + $0x78] sm:$0xff]
    %v115 = vld [vmem:[%s1 + $0x80] sm:$0xff]
    %v116 = vld [vmem:[%s1 + $0x88] sm:$0xff]
    %v117 = vld [vmem:[%s1 + $0x90] sm:$0xff]
    %v118 = vld [vmem:[%s1 + $0x98] sm:$0xff]
    %v119 = vld [vmem:[%s1 + $0xa0] sm:$0xff]
    %v120 = vld [vmem:[%s1 + $0xa8] sm:$0xff]
    %v121 = vld [vmem:[%s1 + $0xb0] sm:$0xff]
    %v122 = vld [vmem:[%s1 + $0xb8] sm:$0xff]
    %v123 = vld [vmem:[%s1 + $0xc0] sm:$0xff]
    %v124 = vld [vmem:[%s1 + $0xc8] sm:$0xff]
    %v125 = vld [vmem:[%s1 + $0xd0] sm:$0xff]
    %v126 = vld [vmem:[%s1 + $0xd8] sm:$0xff]
    %v127 = vld [vmem:[%s1 + $0xe0] sm:$0xff]
    %v128 = vld [vmem:[%s1 + $0xe8] sm:$0xff]
    %v129 = vld [vmem:[%s1 + $0xf0] sm:$0xff]
    %v130 = vld [vmem:[%s1 + $0xf8] sm:$0xff]
    %v131 = vld [vmem:[%s1 + $0x100] sm:$0xff]
    %v132 = vld [vmem:[%s1 + $0x108] sm:$0xff]
    %v133 = vld [vmem:[%s1 + $0x110] sm:$0xff]
    %v134 = vld [vmem:[%s1 + $0x118] sm:$0xff]
    %v135 = vld [vmem:[%s1 + $0x120] sm:$0xff]
    %v136 = vld [vmem:[%s1 + $0x128] sm:$0xff]
    %v137 = vld [vmem:[%s1 + $0x130] sm:$0xff]
    %v138 = vld [vmem:[%s1 + $0x138] sm:$0xff]
    %v139 = vld [vmem:[%s1 + $0x140] sm:$0xff]
    %v140 = vld [vmem:[%s1 + $0x148] sm:$0xff]
    %v141 = vld [vmem:[%s1 + $0x150] sm:$0xff]
    %v142 = vld [vmem:[%s1 + $0x158] sm:$0xff]
    %v143 = vld [vmem:[%s1 + $0x160] sm:$0xff]
    %v144 = vld [vmem:[%s1 + $0x168] sm:$0xff]
    %v145 = vld [vmem:[%s1 + $0x170] sm:$0xff]
    %v146 = vld [vmem:[%s1 + $0x178] sm:$0xff]
    %v147 = vld [vmem:[%s1 + $0x180] sm:$0xff]
    %v148 = vld [vmem:[%s1 + $0x188] sm:$0xff]
    %v149 = vld [vmem:[%s1 + $0x190] sm:$0xff]
    %v150 = vld [vmem:[%s1 + $0x198] sm:$0xff]
    %v151 = vld [vmem:[%s1 + $0x1a0] sm:$0xff]
    %v152 = vld [vmem:[%s1 + $0x1a8] sm:$0xff]
    %v153 = vld [vmem:[%s1 + $0x1b0] sm:$0xff]
    %v154 = vld [vmem:[%s1 + $0x1b8] sm:$0xff]
    %v155 = vld [vmem:[%s1 + $0x1c0] sm:$0xff]
    %v156 = vld [vmem:[%s1 + $0x1c8] sm:$0xff]
    %v157 = vld [vmem:[%s1 + $0x1d0] sm:$0xff]
    %v158 = vld [vmem:[%s1 + $0x1d8] sm:$0xff]
    %v159 = vld [vmem:[%s1 + $0x1e0] sm:$0xff]
    %v160 = vld [vmem:[%s1 + $0x1e8] sm:$0xff]
    %v161 = vld [vmem:[%s1 + $0x1f0] sm:$0xff]
    %v162 = vld [vmem:[%s1 + $0x1f8] sm:$0xff]
    %v227 = vunpack.c.l.b16 %v99
    %v228 = vunpack.c.h.b16 %v99
    %v229 = vunpack.c.l.b16 %v100
    %v230 = vunpack.c.h.b16 %v100
    %v231 = vunpack.c.l.b16 %v101
    %v232 = vunpack.c.h.b16 %v101
    %v233 = vunpack.c.l.b16 %v102
    %v234 = vunpack.c.h.b16 %v102
    %v235 = vunpack.c.l.b16 %v103
    %v236 = vunpack.c.h.b16 %v103
    %v237 = vunpack.c.l.b16 %v104
    %v238 = vunpack.c.h.b16 %v104
    %v239 = vunpack.c.l.b16 %v105
    %v240 = vunpack.c.h.b16 %v105
    %v241 = vunpack.c.l.b16 %v106
    %v242 = vunpack.c.h.b16 %v106
    %v243 = vunpack.c.l.b16 %v107
    %v244 = vunpack.c.h.b16 %v107
    %v245 = vunpack.c.l.b16 %v108
    %v246 = vunpack.c.h.b16 %v108
    %v247 = vunpack.c.l.b16 %v109
    %v248 = vunpack.c.h.b16 %v109
    %v249 = vunpack.c.l.b16 %v110
    %v250 = vunpack.c.h.b16 %v110
    %v251 = vunpack.c.l.b16 %v111
    %v252 = vunpack.c.h.b16 %v111
    %v253 = vunpack.c.l.b16 %v112
    %v254 = vunpack.c.h.b16 %v112
    %v255 = vunpack.c.l.b16 %v113
    %v256 = vunpack.c.h.b16 %v113
    %v257 = vunpack.c.l.b16 %v114
    %v258 = vunpack.c.h.b16 %v114
    %v259 = vunpack.c.l.b16 %v115
    %v260 = vunpack.c.h.b16 %v115
    %v261 = vunpack.c.l.b16 %v116
    %v262 = vunpack.c.h.b16 %v116
    %v263 = vunpack.c.l.b16 %v117
    %v264 = vunpack.c.h.b16 %v117
    %v265 = vunpack.c.l.b16 %v118
    %v266 = vunpack.c.h.b16 %v118
    %v267 = vunpack.c.l.b16 %v119
    %v268 = vunpack.c.h.b16 %v119
    %v269 = vunpack.c.l.b16 %v120
    %v270 = vunpack.c.h.b16 %v120
    %v271 = vunpack.c.l.b16 %v121
    %v272 = vunpack.c.h.b16 %v121
    %v273 = vunpack.c.l.b16 %v122
    %v274 = vunpack.c.h.b16 %v122
    %v275 = vunpack.c.l.b16 %v123
    %v276 = vunpack.c.h.b16 %v123
    %v277 = vunpack.c.l.b16 %v124
    %v278 = vunpack.c.h.b16 %v124
    %v279 = vunpack.c.l.b16 %v125
    %v280 = vunpack.c.h.b16 %v125
    %v281 = vunpack.c.l.b16 %v126
    %v282 = vunpack.c.h.b16 %v126
    %v283 = vunpack.c.l.b16 %v127
    %v284 = vunpack.c.h.b16 %v127
    %v285 = vunpack.c.l.b16 %v128
    %v286 = vunpack.c.h.b16 %v128
    %v287 = vunpack.c.l.b16 %v129
    %v288 = vunpack.c.h.b16 %v129
    %v289 = vunpack.c.l.b16 %v130
    %v290 = vunpack.c.h.b16 %v130
    %v291 = vunpack.c.l.b16 %v131
    %v292 = vunpack.c.h.b16 %v131
    %v293 = vunpack.c.l.b16 %v132
    %v294 = vunpack.c.h.b16 %v132
    %v295 = vunpack.c.l.b16 %v133
    %v296 = vunpack.c.h.b16 %v133
    %v297 = vunpack.c.l.b16 %v134
    %v298 = vunpack.c.h.b16 %v134
    %v299 = vunpack.c.l.b16 %v135
    %v300 = vunpack.c.h.b16 %v135
    %v301 = vunpack.c.l.b16 %v136
    %v302 = vunpack.c.h.b16 %v136
    %v303 = vunpack.c.l.b16 %v137
    %v304 = vunpack.c.h.b16 %v137
    %v305 = vunpack.c.l.b16 %v138
    %v306 = vunpack.c.h.b16 %v138
    %v307 = vunpack.c.l.b16 %v139
    %v308 = vunpack.c.h.b16 %v139
    %v309 = vunpack.c.l.b16 %v140
    %v310 = vunpack.c.h.b16 %v140
    %v311 = vunpack.c.l.b16 %v141
    %v312 = vunpack.c.h.b16 %v141
    %v313 = vunpack.c.l.b16 %v142
    %v314 = vunpack.c.h.b16 %v142
    %v315 = vunpack.c.l.b16 %v143
    %v316 = vunpack.c.h.b16 %v143
    %v317 = vunpack.c.l.b16 %v144
    %v318 = vunpack.c.h.b16 %v144
    %v319 = vunpack.c.l.b16 %v145
    %v320 = vunpack.c.h.b16 %v145
    %v321 = vunpack.c.l.b16 %v146
    %v322 = vunpack.c.h.b16 %v146
    %v323 = vunpack.c.l.b16 %v147
    %v324 = vunpack.c.h.b16 %v147
    %v325 = vunpack.c.l.b16 %v148
    %v326 = vunpack.c.h.b16 %v148
    %v327 = vunpack.c.l.b16 %v149
    %v328 = vunpack.c.h.b16 %v149
    %v329 = vunpack.c.l.b16 %v150
    %v330 = vunpack.c.h.b16 %v150
    %v331 = vunpack.c.l.b16 %v151
    %v332 = vunpack.c.h.b16 %v151
    %v333 = vunpack.c.l.b16 %v152
    %v334 = vunpack.c.h.b16 %v152
    %v335 = vunpack.c.l.b16 %v153
    %v336 = vunpack.c.h.b16 %v153
    %v337 = vunpack.c.l.b16 %v154
    %v338 = vunpack.c.h.b16 %v154
    %v339 = vunpack.c.l.b16 %v155
    %v340 = vunpack.c.h.b16 %v155
    %v341 = vunpack.c.l.b16 %v156
    %v342 = vunpack.c.h.b16 %v156
    %v343 = vunpack.c.l.b16 %v157
    %v344 = vunpack.c.h.b16 %v157
    %v345 = vunpack.c.l.b16 %v158
    %v346 = vunpack.c.h.b16 %v158
    %v347 = vunpack.c.l.b16 %v159
    %v348 = vunpack.c.h.b16 %v159
    %v349 = vunpack.c.l.b16 %v160
    %v350 = vunpack.c.h.b16 %v160
    %v351 = vunpack.c.l.b16 %v161
    %v352 = vunpack.c.h.b16 %v161
    %v353 = vunpack.c.l.b16 %v162
    %v354 = vunpack.c.h.b16 %v162
    %v355 = vpack.c.b16 %v231, %v227
    %v356 = vpack.c.b16 %v232, %v228
    %v357 = vpack.c.b16 %v233, %v229
    %v358 = vpack.c.b16 %v234, %v230
    %v359 = vpack.c.b16 %v239, %v235
    %v360 = vpack.c.b16 %v240, %v236
    %v361 = vpack.c.b16 %v241, %v237
    %v362 = vpack.c.b16 %v242, %v238
    %v363 = vpack.c.b16 %v247, %v243
    %v364 = vpack.c.b16 %v248, %v244
    %v365 = vpack.c.b16 %v249, %v245
    %v366 = vpack.c.b16 %v250, %v246
    %v367 = vpack.c.b16 %v255, %v251
    %v368 = vpack.c.b16 %v256, %v252
    %v369 = vpack.c.b16 %v257, %v253
    %v370 = vpack.c.b16 %v258, %v254
    %v371 = vpack.c.b16 %v263, %v259
    %v372 = vpack.c.b16 %v264, %v260
    %v373 = vpack.c.b16 %v265, %v261
    %v374 = vpack.c.b16 %v266, %v262
    %v375 = vpack.c.b16 %v271, %v267
    %v376 = vpack.c.b16 %v272, %v268
    %v377 = vpack.c.b16 %v273, %v269
    %v378 = vpack.c.b16 %v274, %v270
    %v379 = vpack.c.b16 %v279, %v275
    %v380 = vpack.c.b16 %v280, %v276
    %v381 = vpack.c.b16 %v281, %v277
    %v382 = vpack.c.b16 %v282, %v278
    %v383 = vpack.c.b16 %v287, %v283
    %v384 = vpack.c.b16 %v288, %v284
    %v385 = vpack.c.b16 %v289, %v285
    %v386 = vpack.c.b16 %v290, %v286
    %v387 = vpack.c.b16 %v295, %v291
    %v388 = vpack.c.b16 %v296, %v292
    %v389 = vpack.c.b16 %v297, %v293
    %v390 = vpack.c.b16 %v298, %v294
    %v391 = vpack.c.b16 %v303, %v299
    %v392 = vpack.c.b16 %v304, %v300
    %v393 = vpack.c.b16 %v305, %v301
    %v394 = vpack.c.b16 %v306, %v302
    %v395 = vpack.c.b16 %v311, %v307
    %v396 = vpack.c.b16 %v312, %v308
    %v397 = vpack.c.b16 %v313, %v309
    %v398 = vpack.c.b16 %v314, %v310
    %v399 = vpack.c.b16 %v319, %v315
    %v400 = vpack.c.b16 %v320, %v316
    %v401 = vpack.c.b16 %v321, %v317
    %v402 = vpack.c.b16 %v322, %v318
    %v403 = vpack.c.b16 %v327, %v323
    %v404 = vpack.c.b16 %v328, %v324
    %v405 = vpack.c.b16 %v329, %v325
    %v406 = vpack.c.b16 %v330, %v326
    %v407 = vpack.c.b16 %v335, %v331
    %v408 = vpack.c.b16 %v336, %v332
    %v409 = vpack.c.b16 %v337, %v333
    %v410 = vpack.c.b16 %v338, %v334
    %v411 = vpack.c.b16 %v343, %v339
    %v412 = vpack.c.b16 %v344, %v340
    %v413 = vpack.c.b16 %v345, %v341
    %v414 = vpack.c.b16 %v346, %v342
    %v415 = vpack.c.b16 %v351, %v347
    %v416 = vpack.c.b16 %v352, %v348
    %v417 = vpack.c.b16 %v353, %v349
    %v418 = vpack.c.b16 %v354, %v350
    %483 = vmatpush.bf16.msra.mxu0 %v383
    %484 = vmatpush.bf16.msra.mxu0 %v379
    %485 = vmatpush.bf16.msra.mxu0 %v375
    %486 = vmatpush.bf16.msra.mxu0 %v371
    %487 = vmatpush.bf16.msra.mxu0 %v367
    %488 = vmatpush.bf16.msra.mxu0 %v363
    %489 = vmatpush.bf16.msra.mxu0 %v359
    %490 = vmatpush.bf16.msra.mxu0 %v355
    %491 = vmatmul.bf16.gmra.mxu0 %v97
    %v492 = vpop.f32.mrf.mxu0
    %v493 = vadd.f32 0.0, %v492
    %v494 = vpop.f32.mrf.mxu0
    %495 = vdwg.mxu0
    %496 = vmatpush.bf16.msra.mxu0 %v415
    %497 = vmatpush.bf16.msra.mxu0 %v411
    %498 = vmatpush.bf16.msra.mxu0 %v407
    %499 = vmatpush.bf16.msra.mxu0 %v403
    %500 = vmatpush.bf16.msra.mxu0 %v399
    %501 = vmatpush.bf16.msra.mxu0 %v395
    %502 = vmatpush.bf16.msra.mxu0 %v391
    %503 = vmatpush.bf16.msra.mxu0 %v387
    %504 = vmatmul.bf16.gmra.mxu0 %v98
    %v505 = vpop.f32.mrf.mxu0
    %v506 = vadd.f32 %v493, %v505
    %v507 = vpop.f32.mrf.mxu0
    %508 = vdwg.mxu0
    %509 = vmatpush.bf16.msra.mxu0 %v384
    %510 = vmatpush.bf16.msra.mxu0 %v380
    %511 = vmatpush.bf16.msra.mxu0 %v376
    %512 = vmatpush.bf16.msra.mxu0 %v372
    %513 = vmatpush.bf16.msra.mxu0 %v368
    %514 = vmatpush.bf16.msra.mxu0 %v364
    %515 = vmatpush.bf16.msra.mxu0 %v360
    %516 = vmatpush.bf16.msra.mxu0 %v356
    %517 = vmatmul.bf16.gmra.mxu0 %v97
    %v518 = vpop.f32.mrf.mxu0
    %v519 = vadd.f32 0.0, %v518
    %v520 = vpop.f32.mrf.mxu0
    %521 = vdwg.mxu0
    %522 = vmatpush.bf16.msra.mxu0 %v416
    %523 = vmatpush.bf16.msra.mxu0 %v412
    %524 = vmatpush.bf16.msra.mxu0 %v408
    %525 = vmatpush.bf16.msra.mxu0 %v404
    %526 = vmatpush.bf16.msra.mxu0 %v400
    %527 = vmatpush.bf16.msra.mxu0 %v396
    %528 = vmatpush.bf16.msra.mxu0 %v392
    %529 = vmatpush.bf16.msra.mxu0 %v388
    %530 = vmatmul.bf16.gmra.mxu0 %v98
    %v531 = vpop.f32.mrf.mxu0
    %v532 = vadd.f32 %v519, %v531
    %v533 = vpop.f32.mrf.mxu0
    %534 = vdwg.mxu0
    %535 = vmatpush.bf16.msra.mxu0 %v385
    %536 = vmatpush.bf16.msra.mxu0 %v381
    %537 = vmatpush.bf16.msra.mxu0 %v377
    %538 = vmatpush.bf16.msra.mxu0 %v373
    %539 = vmatpush.bf16.msra.mxu0 %v369
    %540 = vmatpush.bf16.msra.mxu0 %v365
    %541 = vmatpush.bf16.msra.mxu0 %v361
    %542 = vmatpush.bf16.msra.mxu0 %v357
    %543 = vmatmul.bf16.gmra.mxu0 %v97
    %v544 = vpop.f32.mrf.mxu0
    %v545 = vadd.f32 0.0, %v544
    %v546 = vpop.f32.mrf.mxu0
    %547 = vdwg.mxu0
    %548 = vmatpush.bf16.msra.mxu0 %v417
    %549 = vmatpush.bf16.msra.mxu0 %v413
    %550 = vmatpush.bf16.msra.mxu0 %v409
    %551 = vmatpush.bf16.msra.mxu0 %v405
    %552 = vmatpush.bf16.msra.mxu0 %v401
    %553 = vmatpush.bf16.msra.mxu0 %v397
    %554 = vmatpush.bf16.msra.mxu0 %v393
    %555 = vmatpush.bf16.msra.mxu0 %v389
    %556 = vmatmul.bf16.gmra.mxu0 %v98
    %v557 = vpop.f32.mrf.mxu0
    %v558 = vadd.f32 %v545, %v557
    %v559 = vpop.f32.mrf.mxu0
    %560 = vdwg.mxu0
    %561 = vmatpush.bf16.msra.mxu0 %v386
    %562 = vmatpush.bf16.msra.mxu0 %v382
    %563 = vmatpush.bf16.msra.mxu0 %v378
    %564 = vmatpush.bf16.msra.mxu0 %v374
    %565 = vmatpush.bf16.msra.mxu0 %v370
    %566 = vmatpush.bf16.msra.mxu0 %v366
    %567 = vmatpush.bf16.msra.mxu0 %v362
    %568 = vmatpush.bf16.msra.mxu0 %v358
    %569 = vmatmul.bf16.gmra.mxu0 %v97
    %v570 = vpop.f32.mrf.mxu0
    %v571 = vadd.f32 0.0, %v570
    %v572 = vpop.f32.mrf.mxu0
    %573 = vdwg.mxu0
    %574 = vmatpush.bf16.msra.mxu0 %v418
    %575 = vmatpush.bf16.msra.mxu0 %v414
    %576 = vmatpush.bf16.msra.mxu0 %v410
    %577 = vmatpush.bf16.msra.mxu0 %v406
    %578 = vmatpush.bf16.msra.mxu0 %v402
    %579 = vmatpush.bf16.msra.mxu0 %v398
    %580 = vmatpush.bf16.msra.mxu0 %v394
    %581 = vmatpush.bf16.msra.mxu0 %v390
    %582 = vmatmul.bf16.gmra.mxu0 %v98
    %v583 = vpop.f32.mrf.mxu0
    %v584 = vadd.f32 %v571, %v583
    %v585 = vpop.f32.mrf.mxu0
    %586 = vdwg.mxu0
    %v587 = vadd.s32 %v38, 256
    %v588 = vadd.s32 %v38, 384
    %v589 = vshra.s32 %v38, 5
    %v590 = vshra.s32 %v39, 5
    %v591 = vshra.s32 %v587, 5
    %v592 = vshra.s32 %v588, 5
    %593 = vset.pattern.permute.xlu0 0
    %594 = vperm.xlu0 %593, %v35
    %v595 = vpop.permute.xlu0 %594
    %vm596 = vcmp.eq.s32.totalorder %v589, %v595
    %vm597 = vcmp.eq.s32.totalorder %v590, %v595
    %vm598 = vcmp.eq.s32.totalorder %v591, %v595
    %vm599 = vcmp.eq.s32.totalorder %v592, %v595
    %600 = vset.pattern.permute.xlu0 0
    %601 = vperm.xlu0 %600, %v49
    %v602 = vpop.permute.xlu0 %601
    %v604 = vsel %vm596, %v602, 0.0
    %v605 = vsel %vm597, %v602, 0.0
    %v606 = vsel %vm598, %v602, 0.0
    %v607 = vsel %vm599, %v602, 0.0
    %608 = vset.pattern.permute.xlu0 0
    %609 = vperm.xlu0 %608, %v36
    %v610 = vpop.permute.xlu0 %609
    %vm611 = vcmp.eq.s32.totalorder %v589, %v610
    %vm612 = vcmp.eq.s32.totalorder %v590, %v610
    %vm613 = vcmp.eq.s32.totalorder %v591, %v610
    %vm614 = vcmp.eq.s32.totalorder %v592, %v610
    %615 = vset.pattern.permute.xlu0 0
    %616 = vperm.xlu0 %615, %v34
    %v617 = vpop.permute.xlu0 %616
    %v619 = vsel %vm611, %v617, 0.0
    %v620 = vsel %vm612, %v617, 0.0
    %v621 = vsel %vm613, %v617, 0.0
    %v622 = vsel %vm614, %v617, 0.0
    %v623 = vadd.f32 %v604, %v619
    %v624 = vadd.f32 %v605, %v620
    %v625 = vadd.f32 %v606, %v621
    %v626 = vadd.f32 %v607, %v622
    %v627 = vmul.f32 %v506, %v623
    %v628 = vmul.f32 %v532, %v624
    %v629 = vmul.f32 %v558, %v625
    %v630 = vmul.f32 %v584, %v626
    %v631 = vld [vmem:[%s2] sm:$0xff]
    %v632 = vld [vmem:[%s2 + $0x8] sm:$0xff]
    %v633 = vld [vmem:[%s2 + $0x10] sm:$0xff]
    %v634 = vld [vmem:[%s2 + $0x18] sm:$0xff]
    %v635 = vld [vmem:[%s2 + $0x20] sm:$0xff]
    %v636 = vld [vmem:[%s2 + $0x28] sm:$0xff]
    %v637 = vld [vmem:[%s2 + $0x30] sm:$0xff]
    %v638 = vld [vmem:[%s2 + $0x38] sm:$0xff]
    %v639 = vld [vmem:[%s2 + $0x40] sm:$0xff]
    %v640 = vld [vmem:[%s2 + $0x48] sm:$0xff]
    %v641 = vld [vmem:[%s2 + $0x50] sm:$0xff]
    %v642 = vld [vmem:[%s2 + $0x58] sm:$0xff]
    %v643 = vld [vmem:[%s2 + $0x60] sm:$0xff]
    %v644 = vld [vmem:[%s2 + $0x68] sm:$0xff]
    %v645 = vld [vmem:[%s2 + $0x70] sm:$0xff]
    %v646 = vld [vmem:[%s2 + $0x78] sm:$0xff]
    %v647 = vld [vmem:[%s2 + $0x80] sm:$0xff]
    %v648 = vld [vmem:[%s2 + $0x88] sm:$0xff]
    %v649 = vld [vmem:[%s2 + $0x90] sm:$0xff]
    %v650 = vld [vmem:[%s2 + $0x98] sm:$0xff]
    %v651 = vld [vmem:[%s2 + $0xa0] sm:$0xff]
    %v652 = vld [vmem:[%s2 + $0xa8] sm:$0xff]
    %v653 = vld [vmem:[%s2 + $0xb0] sm:$0xff]
    %v654 = vld [vmem:[%s2 + $0xb8] sm:$0xff]
    %v655 = vld [vmem:[%s2 + $0xc0] sm:$0xff]
    %v656 = vld [vmem:[%s2 + $0xc8] sm:$0xff]
    %v657 = vld [vmem:[%s2 + $0xd0] sm:$0xff]
    %v658 = vld [vmem:[%s2 + $0xd8] sm:$0xff]
    %v659 = vld [vmem:[%s2 + $0xe0] sm:$0xff]
    %v660 = vld [vmem:[%s2 + $0xe8] sm:$0xff]
    %v661 = vld [vmem:[%s2 + $0xf0] sm:$0xff]
    %v662 = vld [vmem:[%s2 + $0xf8] sm:$0xff]
    %v663 = vld [vmem:[%s2 + $0x100] sm:$0xff]
    %v664 = vld [vmem:[%s2 + $0x108] sm:$0xff]
    %v665 = vld [vmem:[%s2 + $0x110] sm:$0xff]
    %v666 = vld [vmem:[%s2 + $0x118] sm:$0xff]
    %v667 = vld [vmem:[%s2 + $0x120] sm:$0xff]
    %v668 = vld [vmem:[%s2 + $0x128] sm:$0xff]
    %v669 = vld [vmem:[%s2 + $0x130] sm:$0xff]
    %v670 = vld [vmem:[%s2 + $0x138] sm:$0xff]
    %v671 = vld [vmem:[%s2 + $0x140] sm:$0xff]
    %v672 = vld [vmem:[%s2 + $0x148] sm:$0xff]
    %v673 = vld [vmem:[%s2 + $0x150] sm:$0xff]
    %v674 = vld [vmem:[%s2 + $0x158] sm:$0xff]
    %v675 = vld [vmem:[%s2 + $0x160] sm:$0xff]
    %v676 = vld [vmem:[%s2 + $0x168] sm:$0xff]
    %v677 = vld [vmem:[%s2 + $0x170] sm:$0xff]
    %v678 = vld [vmem:[%s2 + $0x178] sm:$0xff]
    %v679 = vld [vmem:[%s2 + $0x180] sm:$0xff]
    %v680 = vld [vmem:[%s2 + $0x188] sm:$0xff]
    %v681 = vld [vmem:[%s2 + $0x190] sm:$0xff]
    %v682 = vld [vmem:[%s2 + $0x198] sm:$0xff]
    %v683 = vld [vmem:[%s2 + $0x1a0] sm:$0xff]
    %v684 = vld [vmem:[%s2 + $0x1a8] sm:$0xff]
    %v685 = vld [vmem:[%s2 + $0x1b0] sm:$0xff]
    %v686 = vld [vmem:[%s2 + $0x1b8] sm:$0xff]
    %v687 = vld [vmem:[%s2 + $0x1c0] sm:$0xff]
    %v688 = vld [vmem:[%s2 + $0x1c8] sm:$0xff]
    %v689 = vld [vmem:[%s2 + $0x1d0] sm:$0xff]
    %v690 = vld [vmem:[%s2 + $0x1d8] sm:$0xff]
    %v691 = vld [vmem:[%s2 + $0x1e0] sm:$0xff]
    %v692 = vld [vmem:[%s2 + $0x1e8] sm:$0xff]
    %v693 = vld [vmem:[%s2 + $0x1f0] sm:$0xff]
    %v694 = vld [vmem:[%s2 + $0x1f8] sm:$0xff]
    %v695 = vld [vmem:[%s3] sm:$0x1]
    %v697 = vperm.slane %v695, 0
    %699 = vmatpush.msra.mxu0 %v646
    %700 = vmatpush.msra.mxu0 %v645
    %701 = vmatpush.msra.mxu0 %v644
    %702 = vmatpush.msra.mxu0 %v643
    %703 = vmatpush.msra.mxu0 %v642
    %704 = vmatpush.msra.mxu0 %v641
    %705 = vmatpush.msra.mxu0 %v640
    %706 = vmatpush.msra.mxu0 %v639
    %707 = vmatpush.msra.mxu0 %v638
    %708 = vmatpush.msra.mxu0 %v637
    %709 = vmatpush.msra.mxu0 %v636
    %710 = vmatpush.msra.mxu0 %v635
    %711 = vmatpush.msra.mxu0 %v634
    %712 = vmatpush.msra.mxu0 %v633
    %713 = vmatpush.msra.mxu0 %v632
    %714 = vmatpush.msra.mxu0 %v631
    %715 = vmatmul.f32.gmra.mxu0 %v627
    %v716 = vpop.f32.mrf.mxu0
    %v717 = vadd.f32 %v697, %v716
    %718 = vdwg.mxu0
    %719 = vmatpush.msra.mxu0 %v662
    %720 = vmatpush.msra.mxu0 %v661
    %721 = vmatpush.msra.mxu0 %v660
    %722 = vmatpush.msra.mxu0 %v659
    %723 = vmatpush.msra.mxu0 %v658
    %724 = vmatpush.msra.mxu0 %v657
    %725 = vmatpush.msra.mxu0 %v656
    %726 = vmatpush.msra.mxu0 %v655
    %727 = vmatpush.msra.mxu0 %v654
    %728 = vmatpush.msra.mxu0 %v653
    %729 = vmatpush.msra.mxu0 %v652
    %730 = vmatpush.msra.mxu0 %v651
    %731 = vmatpush.msra.mxu0 %v650
    %732 = vmatpush.msra.mxu0 %v649
    %733 = vmatpush.msra.mxu0 %v648
    %734 = vmatpush.msra.mxu0 %v647
    %735 = vmatmul.f32.gmra.mxu0 %v628
    %v736 = vpop.f32.mrf.mxu0
    %v737 = vadd.f32 %v717, %v736
    %738 = vdwg.mxu0
    %739 = vmatpush.msra.mxu0 %v678
    %740 = vmatpush.msra.mxu0 %v677
    %741 = vmatpush.msra.mxu0 %v676
    %742 = vmatpush.msra.mxu0 %v675
    %743 = vmatpush.msra.mxu0 %v674
    %744 = vmatpush.msra.mxu0 %v673
    %745 = vmatpush.msra.mxu0 %v672
    %746 = vmatpush.msra.mxu0 %v671
    %747 = vmatpush.msra.mxu0 %v670
    %748 = vmatpush.msra.mxu0 %v669
    %749 = vmatpush.msra.mxu0 %v668
    %750 = vmatpush.msra.mxu0 %v667
    %751 = vmatpush.msra.mxu0 %v666
    %752 = vmatpush.msra.mxu0 %v665
    %753 = vmatpush.msra.mxu0 %v664
    %754 = vmatpush.msra.mxu0 %v663
    %755 = vmatmul.f32.gmra.mxu0 %v629
    %v756 = vpop.f32.mrf.mxu0
    %v757 = vadd.f32 %v737, %v756
    %758 = vdwg.mxu0
    %759 = vmatpush.msra.mxu0 %v694
    %760 = vmatpush.msra.mxu0 %v693
    %761 = vmatpush.msra.mxu0 %v692
    %762 = vmatpush.msra.mxu0 %v691
    %763 = vmatpush.msra.mxu0 %v690
    %764 = vmatpush.msra.mxu0 %v689
    %765 = vmatpush.msra.mxu0 %v688
    %766 = vmatpush.msra.mxu0 %v687
    %767 = vmatpush.msra.mxu0 %v686
    %768 = vmatpush.msra.mxu0 %v685
    %769 = vmatpush.msra.mxu0 %v684
    %770 = vmatpush.msra.mxu0 %v683
    %771 = vmatpush.msra.mxu0 %v682
    %772 = vmatpush.msra.mxu0 %v681
    %773 = vmatpush.msra.mxu0 %v680
    %774 = vmatpush.msra.mxu0 %v679
    %775 = vmatmul.f32.gmra.mxu0 %v630
    %v776 = vpop.f32.mrf.mxu0
    %v777 = vadd.f32 %v757, %v776
    %778 = vdwg.mxu0
    %v779 = vmax.f32 %v777, 0.0
    %v780 = vld [vmem:[%s4] sm:$0xff]
    %v781 = vld [vmem:[%s4 + $0x8] sm:$0xff]
    %v782 = vld [vmem:[%s4 + $0x10] sm:$0xff]
    %v783 = vld [vmem:[%s4 + $0x18] sm:$0xff]
    %v784 = vld [vmem:[%s5] sm:$0x1]
    %v786 = vperm.slane %v784, 0
    %vm788 = vcmask 261120
    %v790 = vsel %vm788, %v779, 0
    %792 = vmatpush.msra.mxu0 0.0
    %793 = vmatpush.msra.mxu0 0.0
    %794 = vmatpush.msra.mxu0 0.0
    %795 = vmatpush.msra.mxu0 0.0
    %796 = vmatpush.msra.mxu0 0.0
    %797 = vmatpush.msra.mxu0 0.0
    %798 = vmatpush.msra.mxu0 0.0
    %799 = vmatpush.msra.mxu0 0.0
    %800 = vmatpush.msra.mxu0 0.0
    %801 = vmatpush.msra.mxu0 0.0
    %802 = vmatpush.msra.mxu0 0.0
    %803 = vmatpush.msra.mxu0 0.0
    %804 = vmatpush.msra.mxu0 %v783
    %805 = vmatpush.msra.mxu0 %v782
    %806 = vmatpush.msra.mxu0 %v781
    %807 = vmatpush.msra.mxu0 %v780
    %808 = vmatmul.f32.gmra.mxu0 %v790
    %v809 = vpop.f32.mrf.mxu0
    %v810 = vadd.f32 %v786, %v809
    %811 = vdwg.mxu0
    %v812 = vmax.f32 %v810, 0.0
    %v813 = vld [vmem:[%s6] sm:$0xff]
    %v814 = vld [vmem:[%s6 + $0x8] sm:$0xff]
    %v815 = vld [vmem:[%s6 + $0x10] sm:$0xff]
    %v816 = vld [vmem:[%s6 + $0x18] sm:$0xff]
    %v817 = vld [vmem:[%s7] sm:$0x1]
    %v819 = vperm.slane %v817, 0
    %v822 = vsel %vm788, %v812, 0
    %824 = vmatpush.msra.mxu0 0.0
    %825 = vmatpush.msra.mxu0 0.0
    %826 = vmatpush.msra.mxu0 0.0
    %827 = vmatpush.msra.mxu0 0.0
    %828 = vmatpush.msra.mxu0 0.0
    %829 = vmatpush.msra.mxu0 0.0
    %830 = vmatpush.msra.mxu0 0.0
    %831 = vmatpush.msra.mxu0 0.0
    %832 = vmatpush.msra.mxu0 0.0
    %833 = vmatpush.msra.mxu0 0.0
    %834 = vmatpush.msra.mxu0 0.0
    %835 = vmatpush.msra.mxu0 0.0
    %836 = vmatpush.msra.mxu0 %v816
    %837 = vmatpush.msra.mxu0 %v815
    %838 = vmatpush.msra.mxu0 %v814
    %839 = vmatpush.msra.mxu0 %v813
    %840 = vmatmul.f32.gmra.mxu0 %v822
    %v841 = vpop.f32.mrf.mxu0
    %v842 = vadd.f32 %v819, %v841
    %843 = vdwg.mxu0
    %v844 = vxor.u32 %v842, 2147483648
    %v845 = vmul.f32 %v844, 1.442695
    %v846 = vpow.pop %v845
    %v847 = vadd.f32 %v846, 1.0
    %v848 = vrcp.pop %v847
    %v849 = vmul.f32 %v847, %v848
    %v850 = vsub.f32 1.0, %v849
    %v851 = vmul.f32 %v848, %v850
    %v852 = vadd.f32 %v848, %v851
    %vm853 = vweird.f32 %v847
    %vm854 = vweird.f32 %v848
    %vm855 = vmor %vm853, %vm854
    %v856 = vsel %vm855, %v848, %v852
    %v857 = vand.u32 2147483647, %v847
    %vm858 = vcmp.eq.f32.partialorder %v857, 8.507059e+37
    %v859 = vand.u32 %v847, 2147483648
    %v860 = vor.u32 1.1754944e-38, %v859
    %v861 = vsel %vm858, %v860, %v856
    %v862 = vmul.f32 1.0, %v861
    %863 = vst [vmem:[#allocation2] sm:$0xff] %v862
    // Predicated region
    $region34: #{tpu_custom_call.1} parent=1 // pred_check
      _
    $region35: #{tpu_custom_call.1} parent=1 // pred_check_branch
      %865 = sbr.rel (0) target = $region37
    $region36: #{tpu_custom_call.1} parent=1 // pred_region
      %867 = vsyncadd [#allocation3], 0
      %s869 = sshll.u32 [#allocation2], 4
      %s870 = int_to_ptr.vmem [resolvable:$true] %s869
      %s871 = sshll.u32 %s8, 4
      %s872 = int_to_ptr.hbm [resolvable:$true] %s871
      %874 = dma.vmem_to_hbm [thread:$0]  %s870, 128, %s872, [#allocation3]
    $region37: #{tpu_custom_call.1} parent=1 // pred_fallthru
      _
    // Predicated region
    $region38: #{tpu_custom_call.1} parent=1 // pred_check
      _
    $region39: #{tpu_custom_call.1} parent=1 // pred_check_branch
      %876 = sbr.rel (0) target = $region41
    $region40: #{tpu_custom_call.1} parent=1 // pred_region
      %878 = dma.done [#allocation3], 128
    $region41: #{tpu_custom_call.1} parent=1 // pred_fallthru
      _
    %879 = vsyncpa [#allocation3], 1

</llo_original>
